<compile_context>
chip_gen: v5e
topology: v5e:2x2
jax: 0.10.0
libtpu: 0.0.40
codegen_flags: <defaults>
</compile_context>

<pallas_src>
import math
from functools import partial

import jax
import jax.numpy as jnp
from jax import lax
from jax.experimental import pallas as pl
from jax.experimental.pallas import tpu as pltpu

D_MODEL = 32
NHEAD = 4
DIM_FF = 64
SEQ = 8
BATCH = 2
EPS = 1e-5          # nn.LayerNorm default
NEG_INF = -1e30

# ---- packed-operand layout constants (shared by wrapper and kernel) ----------
# Weight slab: every sub-matrix starts at a lane offset that is a multiple of
# 128 -> in-kernel lane slices are free views (no XLU lane rotations).
WQ_OFF, WK_OFF, WV_OFF, WO_OFF, W1_OFF = 0, 128, 256, 384, 512
W_SLAB_W = 640
# Aux slab (64 lanes wide): mask blocks + parameter rows.  Every block starts
# at lane 0; block sublane offsets are multiples of 8.
AUX_W = 64
# parameter-row indices (relative to the parameter block base row)
PB_Q, PB_K, PB_V, PB_O, PB_1, PB_2, PG_1, PBE_1, PG_2, PBE_2 = range(10)
N_PARAM_ROWS = 10


def _layer_norm(x, gamma, beta):
    mu = jnp.mean(x, axis=-1, keepdims=True)
    xc = x - mu
    var = jnp.mean(xc * xc, axis=-1, keepdims=True)
    return xc * lax.rsqrt(var + EPS) * gamma + beta


def encoder_layer_kernel(sp_ref, w_ref, w2_ref, aux_ref, out_ref, *, n, nhead):
    d = out_ref.shape[-1]                     # model dim
    ff = w2_ref.shape[0]                      # feed-forward dim
    hn = nhead * n
    f32 = jnp.float32

    # aux-slab row offsets (identical formula in the wrapper)
    headmask_r = 0
    group_r = hn
    batch_r = 2 * hn
    param_r = 2 * hn + n

    def prow(idx, width):
        # one parameter row, lane-0 aligned -> free view + sublane broadcast
        return aux_ref[param_r + idx:param_r + idx + 1, :width]

    # ---- inputs: rows 0:n = src, rows n:2n = pos_embed ----------------------
    x = sp_ref[0:n, :].astype(f32)            # value path uses src only
    qk_in = x + sp_ref[n:2 * n, :].astype(f32)

    # ---- Q / K / V projections (pre-transposed, 128-aligned slab slices;
    #      1/sqrt(head_dim) pre-folded into W_q and b_q) ----------------------
    q = jnp.dot(qk_in, w_ref[:, WQ_OFF:WQ_OFF + d],
                preferred_element_type=f32) + prow(PB_Q, d)
    k = jnp.dot(qk_in, w_ref[:, WK_OFF:WK_OFF + d],
                preferred_element_type=f32) + prow(PB_K, d)
    v = jnp.dot(x, w_ref[:, WV_OFF:WV_OFF + d],
                preferred_element_type=f32) + prow(PB_V, d)

    # ---- multi-head attention via block-diagonal K / V ----------------------
    # Row r of k_blk / v_blk is (head h = r // n, key row j = r % n); lanes
    # outside head h are zeroed by the precomputed head_mask, so heads stay
    # independent while attention is three full-lane-width MXU matmuls.
    head_mask = aux_ref[headmask_r:headmask_r + hn, :d]            # (H*N, D)
    k_blk = jnp.concatenate([k] * nhead, axis=0) * head_mask       # (H*N, D)
    v_blk = jnp.concatenate([v] * nhead, axis=0) * head_mask       # (H*N, D)

    # scores[i, h*n + j] = <q_i, k_j> restricted to head h (already scaled)
    s = lax.dot_general(q, k_blk, (((1,), (1,)), ((), ())),
                        preferred_element_type=f32)                # (N, H*N)
    # additive cross-batch mask (0 / -1e30), precomputed at trace time
    s = s + aux_ref[batch_r:batch_r + n, :]

    # softmax per (query, head): global row-max shift is uniform within every
    # head group, hence exact; group denominators via a block-diag-ones matmul;
    # divide goes to the EUP via approx reciprocal.
    s = s - jnp.max(s, axis=-1, keepdims=True)
    e = jnp.exp(s)
    denom = jnp.dot(e, aux_ref[group_r:group_r + hn, :],
                    preferred_element_type=f32)                    # (N, H*N)
    p = e * pl.reciprocal(denom, approx=True)

    attn = jnp.dot(p, v_blk, preferred_element_type=f32)           # (N, D)
    attn = jnp.dot(attn, w_ref[:, WO_OFF:WO_OFF + d],
                   preferred_element_type=f32) + prow(PB_O, d)

    # ---- residual + norm1, FFN, residual + norm2 ----------------------------
    # TODO(synk): training-mode nn.Dropout / SoftDropout paths are not lowered
    # (eval-mode identity), and only the attn_mask=None path is implemented.
    h1 = _layer_norm(x + attn, prow(PG_1, d), prow(PBE_1, d))
    f = jnp.maximum(
        jnp.dot(h1, w_ref[:, W1_OFF:W1_OFF + ff],
                preferred_element_type=f32) + prow(PB_1, ff), 0.0)
    f = jnp.dot(f, w2_ref[...], preferred_element_type=f32) + prow(PB_2, d)
    out_ref[...] = _layer_norm(h1 + f, prow(PG_2, d), prow(PBE_2, d)
                               ).astype(out_ref.dtype)


def transformer_encoder_layer(src, pos, P):
    B, S, D = src.shape
    FF = P["w1"].shape[0]
    n = B * S
    hn = NHEAD * n
    hd = D // NHEAD
    scale = 1.0 / math.sqrt(hd)
    f32 = jnp.float32

    # ---- trace-time weight packing: one 128-aligned (D, 640) slab -----------
    wqkv = P["wqkv"]                                   # (3D, D), PyTorch layout
    w_slab = jnp.zeros((D, W_SLAB_W), f32)
    w_slab = w_slab.at[:, WQ_OFF:WQ_OFF + D].set(wqkv[:D].T * scale)
    w_slab = w_slab.at[:, WK_OFF:WK_OFF + D].set(wqkv[D:2 * D].T)
    w_slab = w_slab.at[:, WV_OFF:WV_OFF + D].set(wqkv[2 * D:].T)
    w_slab = w_slab.at[:, WO_OFF:WO_OFF + D].set(P["wo"].T)
    w_slab = w_slab.at[:, W1_OFF:W1_OFF + FF].set(P["w1"].T)
    w2_t = P["w2"].T                                   # (FF, D)

    # ---- trace-time static masks (hoisted out of the kernel) ----------------
    r_head = jnp.arange(hn)[:, None] // n
    c_head = jnp.arange(D)[None, :] // hd
    head_mask = (r_head == c_head).astype(f32)                       # (H*N, D)
    g = jnp.arange(hn) // n
    group_ones = (g[:, None] == g[None, :]).astype(f32)              # (H*N, H*N)
    q_batch = jnp.arange(n)[:, None] // S
    k_batch = (jnp.arange(hn)[None, :] % n) // S
    batch_add = jnp.where(q_batch == k_batch, 0.0, NEG_INF).astype(f32)  # (N, H*N)

    # ---- aux slab: masks + ten lane-0-aligned parameter rows ----------------
    def aux_row(vec):
        vec = jnp.asarray(vec, f32).reshape(1, -1)
        return jnp.pad(vec, ((0, 0), (0, AUX_W - vec.shape[-1])))

    bqkv = P["bqkv"][0]
    params_rows = jnp.concatenate([
        aux_row(bqkv[:D] * scale),     # PB_Q  (scale folded)
        aux_row(bqkv[D:2 * D]),        # PB_K
        aux_row(bqkv[2 * D:]),         # PB_V
        aux_row(P["bo"][0]),           # PB_O
        aux_row(P["b1"][0]),           # PB_1
        aux_row(P["b2"][0]),           # PB_2
        aux_row(P["g1"][0]),           # PG_1
        aux_row(P["be1"][0]),          # PBE_1
        aux_row(P["g2"][0]),           # PG_2
        aux_row(P["be2"][0]),          # PBE_2
    ], axis=0)                         # (10, 64)

    param_r = 2 * hn + n
    aux_rows = ((param_r + N_PARAM_ROWS + 7) // 8) * 8
    aux = jnp.concatenate([
        jnp.pad(head_mask, ((0, 0), (0, AUX_W - D))),   # rows 0      : hn
        group_ones,                                      # rows hn     : 2*hn
        batch_add,                                       # rows 2*hn   : 2*hn+n
        params_rows,                                     # rows param_r: +10
        jnp.zeros((aux_rows - (param_r + N_PARAM_ROWS), AUX_W), f32),
    ], axis=0)

    # ---- fold batch into rows and fuse src/pos into one operand -------------
    srcpos = jnp.concatenate([src.reshape(n, D), pos.reshape(n, D)], axis=0)

    out = pl.pallas_call(
        partial(encoder_layer_kernel, n=n, nhead=NHEAD),
        out_shape=jax.ShapeDtypeStruct((n, D), src.dtype),
        grid_spec=pltpu.PrefetchScalarGridSpec(
            num_scalar_prefetch=0,
            grid=(1,),                       # single step: work is tiny
            in_specs=[
                pl.BlockSpec((2 * n, D), lambda i: (0, 0)),
                pl.BlockSpec((D, W_SLAB_W), lambda i: (0, 0)),
                pl.BlockSpec((FF, D), lambda i: (0, 0)),
                pl.BlockSpec((aux_rows, AUX_W), lambda i: (0, 0)),
            ],
            out_specs=pl.BlockSpec((n, D), lambda i: (0, 0)),
        ),
        compiler_params=pltpu.CompilerParams(
            dimension_semantics=("arbitrary",)),
    )(srcpos, w_slab, w2_t, aux)
    # TODO(synk): on v7x (2 TensorCores) switch to grid=(B,) "parallel" with
    # per-batch blocks (and drop batch_add) to shard the batch across cores.

    return out.reshape(B, S, D)


def ref_forward(src, pos, P):
    """Pure-JAX reference of the same forward pass (eval mode)."""
    D = src.shape[-1]
    H, Hd = NHEAD, D // NHEAD
    qk = src + pos
    q = qk @ P["wqkv"][:D].T + P["bqkv"][0, :D]
    k = qk @ P["wqkv"][D:2 * D].T + P["bqkv"][0, D:2 * D]
    v = src @ P["wqkv"][2 * D:].T + P["bqkv"][0, 2 * D:]
    qh = q.reshape(*q.shape[:-1], H, Hd).transpose(0, 2, 1, 3)
    kh = k.reshape(*k.shape[:-1], H, Hd).transpose(0, 2, 1, 3)
    vh = v.reshape(*v.shape[:-1], H, Hd).transpose(0, 2, 1, 3)
    s = jnp.einsum("bhqd,bhkd->bhqk", qh, kh) / math.sqrt(Hd)
    p = jax.nn.softmax(s, axis=-1)
    a = jnp.einsum("bhqk,bhkd->bhqd", p, vh).transpose(0, 2, 1, 3)
    a = a.reshape(src.shape) @ P["wo"].T + P["bo"][0]

    def ln(x, g, b):
        mu = x.mean(-1, keepdims=True)
        var = ((x - mu) ** 2).mean(-1, keepdims=True)
        return (x - mu) / jnp.sqrt(var + EPS) * g[0] + b[0]

    h1 = ln(src + a, P["g1"], P["be1"])
    ff = jnp.maximum(h1 @ P["w1"].T + P["b1"][0], 0.0) @ P["w2"].T + P["b2"][0]
    return ln(h1 + ff, P["g2"], P["be2"])


if __name__ == "__main__":
    key = jax.random.PRNGKey(0)
    ks = jax.random.split(key, 12)

    def init(k, shape, scale=0.02):
        return jax.random.normal(k, shape, jnp.float32) * scale

    # Deterministic synthetic parameters (PyTorch layouts: Linear y = x@W.T+b).
    params = {
        "wqkv": init(ks[0], (3 * D_MODEL, D_MODEL)),   # in_proj_weight
        "bqkv": init(ks[1], (1, 3 * D_MODEL)),         # in_proj_bias
        "wo":   init(ks[2], (D_MODEL, D_MODEL)),       # out_proj.weight
        "bo":   init(ks[3], (1, D_MODEL)),             # out_proj.bias
        "w1":   init(ks[4], (DIM_FF, D_MODEL)),        # linear1.weight
        "b1":   init(ks[5], (1, DIM_FF)),              # linear1.bias
        "w2":   init(ks[6], (D_MODEL, DIM_FF)),        # linear2.weight
        "b2":   init(ks[7], (1, D_MODEL)),             # linear2.bias
        "g1":   jnp.ones((1, D_MODEL), jnp.float32),   # norm1.weight
        "be1":  jnp.zeros((1, D_MODEL), jnp.float32),  # norm1.bias
        "g2":   jnp.ones((1, D_MODEL), jnp.float32),   # norm2.weight
        "be2":  jnp.zeros((1, D_MODEL), jnp.float32),  # norm2.bias
    }

    src = jax.random.normal(ks[8], (BATCH, SEQ, D_MODEL), jnp.float32)
    pos = jax.random.normal(ks[9], (BATCH, SEQ, D_MODEL), jnp.float32)

    out = transformer_encoder_layer(src, pos, params)
    out = jax.block_until_ready(out)

    ref = ref_forward(src, pos, params)
    assert out.shape == (BATCH, SEQ, D_MODEL)
    assert jnp.allclose(out, ref, atol=1e-4, rtol=1e-4), "mismatch vs reference"

    print("KERNEL_OK")
</pallas_src>

<mosaic_0001>
module attributes {stable_mosaic.version = 11 : i64} {
  func.func @encoder_layer_kernel(%arg0: i32, %arg1: memref<32x32xf32, #tpu.memory_space<vmem>>, %arg2: memref<32x640xf32, #tpu.memory_space<vmem>>, %arg3: memref<64x32xf32, #tpu.memory_space<vmem>>, %arg4: memref<160x64xf32, #tpu.memory_space<vmem>>, %arg5: memref<16x32xf32, #tpu.memory_space<vmem>>) attributes {dimension_semantics = [#tpu.dimension_semantics<arbitrary>], iteration_bounds = array<i64: 1>, scalar_prefetch = 0 : i64, scratch_operands = 0 : i64, tpu.core_type = #tpu.core_type<tc>, window_params = [{pipeline_mode = #tpu.pipeline_mode<synchronous>, transform_indices = @transform_0, window_bounds = array<i64: 32, 32>}, {pipeline_mode = #tpu.pipeline_mode<synchronous>, transform_indices = @transform_1, window_bounds = array<i64: 32, 640>}, {pipeline_mode = #tpu.pipeline_mode<synchronous>, transform_indices = @transform_2, window_bounds = array<i64: 64, 32>}, {pipeline_mode = #tpu.pipeline_mode<synchronous>, transform_indices = @transform_3, window_bounds = array<i64: 160, 64>}, {pipeline_mode = #tpu.pipeline_mode<synchronous>, transform_indices = @transform_4, window_bounds = array<i64: 16, 32>}]} {
    %c0 = arith.constant 0 : index
    %c0_0 = arith.constant 0 : index
    %0 = vector.load %arg1[%c0, %c0_0] : memref<32x32xf32, #tpu.memory_space<vmem>>, vector<16x32xf32>
    %c16 = arith.constant 16 : index
    %c0_1 = arith.constant 0 : index
    %1 = vector.load %arg1[%c16, %c0_1] : memref<32x32xf32, #tpu.memory_space<vmem>>, vector<16x32xf32>
    %2 = arith.addf %0, %1 : vector<16x32xf32>
    %c0_2 = arith.constant 0 : index
    %c0_3 = arith.constant 0 : index
    %3 = vector.load %arg2[%c0_2, %c0_3] : memref<32x640xf32, #tpu.memory_space<vmem>>, vector<32x32xf32>
    %cst = arith.constant dense<0.000000e+00> : vector<16x32xf32>
    %4 = tpu.matmul %2, %3, %cst {dimension_numbers = #tpu.dot_dimension_numbers<[1], [0], [0], [1], [0, 0, 1, 1], [], []>} : vector<16x32xf32>, vector<32x32xf32>, vector<16x32xf32> -> vector<16x32xf32>
    %c144 = arith.constant 144 : index
    %c0_4 = arith.constant 0 : index
    %5 = vector.load %arg4[%c144, %c0_4] : memref<160x64xf32, #tpu.memory_space<vmem>>, vector<1x32xf32>
    %6 = vector.broadcast %5 : vector<1x32xf32> to vector<16x32xf32>
    %7 = arith.addf %4, %6 : vector<16x32xf32>
    %c0_5 = arith.constant 0 : index
    %c128 = arith.constant 128 : index
    %8 = vector.load %arg2[%c0_5, %c128] : memref<32x640xf32, #tpu.memory_space<vmem>>, vector<32x32xf32>
    %cst_6 = arith.constant dense<0.000000e+00> : vector<16x32xf32>
    %9 = tpu.matmul %2, %8, %cst_6 {dimension_numbers = #tpu.dot_dimension_numbers<[1], [0], [0], [1], [0, 0, 1, 1], [], []>} : vector<16x32xf32>, vector<32x32xf32>, vector<16x32xf32> -> vector<16x32xf32>
    %c145 = arith.constant 145 : index
    %c0_7 = arith.constant 0 : index
    %10 = vector.load %arg4[%c145, %c0_7] : memref<160x64xf32, #tpu.memory_space<vmem>>, vector<1x32xf32>
    %11 = vector.broadcast %10 : vector<1x32xf32> to vector<16x32xf32>
    %12 = arith.addf %9, %11 : vector<16x32xf32>
    %c0_8 = arith.constant 0 : index
    %c256 = arith.constant 256 : index
    %13 = vector.load %arg2[%c0_8, %c256] : memref<32x640xf32, #tpu.memory_space<vmem>>, vector<32x32xf32>
    %cst_9 = arith.constant dense<0.000000e+00> : vector<16x32xf32>
    %14 = tpu.matmul %0, %13, %cst_9 {dimension_numbers = #tpu.dot_dimension_numbers<[1], [0], [0], [1], [0, 0, 1, 1], [], []>} : vector<16x32xf32>, vector<32x32xf32>, vector<16x32xf32> -> vector<16x32xf32>
    %c146 = arith.constant 146 : index
    %c0_10 = arith.constant 0 : index
    %15 = vector.load %arg4[%c146, %c0_10] : memref<160x64xf32, #tpu.memory_space<vmem>>, vector<1x32xf32>
    %16 = vector.broadcast %15 : vector<1x32xf32> to vector<16x32xf32>
    %17 = arith.addf %14, %16 : vector<16x32xf32>
    %c0_11 = arith.constant 0 : index
    %c0_12 = arith.constant 0 : index
    %18 = vector.load %arg4[%c0_11, %c0_12] : memref<160x64xf32, #tpu.memory_space<vmem>>, vector<64x32xf32>
    %19 = tpu.concatenate %12, %12, %12, %12 in 0 : vector<16x32xf32>, vector<16x32xf32>, vector<16x32xf32>, vector<16x32xf32> -> vector<64x32xf32>
    %20 = arith.mulf %19, %18 : vector<64x32xf32>
    %21 = tpu.concatenate %17, %17, %17, %17 in 0 : vector<16x32xf32>, vector<16x32xf32>, vector<16x32xf32>, vector<16x32xf32> -> vector<64x32xf32>
    %22 = arith.mulf %21, %18 : vector<64x32xf32>
    %cst_13 = arith.constant dense<0.000000e+00> : vector<16x64xf32>
    %23 = tpu.matmul %7, %20, %cst_13 {dimension_numbers = #tpu.dot_dimension_numbers<[1], [1], [0], [0], [0, 0, 1, 0], [], []>} : vector<16x32xf32>, vector<64x32xf32>, vector<16x64xf32> -> vector<16x64xf32>
    %c128_14 = arith.constant 128 : index
    %c0_15 = arith.constant 0 : index
    %24 = vector.load %arg4[%c128_14, %c0_15] : memref<160x64xf32, #tpu.memory_space<vmem>>, vector<16x64xf32>
    %25 = arith.addf %23, %24 : vector<16x64xf32>
    %cst_16 = arith.constant dense<0xFF800000> : vector<16xf32>
    %26 = vector.multi_reduction <maximumf>, %25, %cst_16 [1] : vector<16x64xf32> to vector<16xf32>
    %27 = vector.shape_cast %26 : vector<16xf32> to vector<16x1xf32>
    %28 = vector.broadcast %27 : vector<16x1xf32> to vector<16x64xf32>
    %29 = arith.subf %25, %28 : vector<16x64xf32>
    %30 = math.exp %29 : vector<16x64xf32>
    %c64 = arith.constant 64 : index
    %c0_17 = arith.constant 0 : index
    %31 = vector.load %arg4[%c64, %c0_17] : memref<160x64xf32, #tpu.memory_space<vmem>>, vector<64x64xf32>
    %cst_18 = arith.constant dense<0.000000e+00> : vector<16x64xf32>
    %32 = tpu.matmul %30, %31, %cst_18 {dimension_numbers = #tpu.dot_dimension_numbers<[1], [0], [0], [1], [0, 0, 1, 1], [], []>} : vector<16x64xf32>, vector<64x64xf32>, vector<16x64xf32> -> vector<16x64xf32>
    %33 = tpu.reciprocal %32 {approx = true} : vector<16x64xf32> -> vector<16x64xf32>
    %34 = arith.mulf %30, %33 : vector<16x64xf32>
    %cst_19 = arith.constant dense<0.000000e+00> : vector<16x32xf32>
    %35 = tpu.matmul %34, %22, %cst_19 {dimension_numbers = #tpu.dot_dimension_numbers<[1], [0], [0], [1], [0, 0, 1, 1], [], []>} : vector<16x64xf32>, vector<64x32xf32>, vector<16x32xf32> -> vector<16x32xf32>
    %c0_20 = arith.constant 0 : index
    %c384 = arith.constant 384 : index
    %36 = vector.load %arg2[%c0_20, %c384] : memref<32x640xf32, #tpu.memory_space<vmem>>, vector<32x32xf32>
    %cst_21 = arith.constant dense<0.000000e+00> : vector<16x32xf32>
    %37 = tpu.matmul %35, %36, %cst_21 {dimension_numbers = #tpu.dot_dimension_numbers<[1], [0], [0], [1], [0, 0, 1, 1], [], []>} : vector<16x32xf32>, vector<32x32xf32>, vector<16x32xf32> -> vector<16x32xf32>
    %c147 = arith.constant 147 : index
    %c0_22 = arith.constant 0 : index
    %38 = vector.load %arg4[%c147, %c0_22] : memref<160x64xf32, #tpu.memory_space<vmem>>, vector<1x32xf32>
    %39 = vector.broadcast %38 : vector<1x32xf32> to vector<16x32xf32>
    %40 = arith.addf %37, %39 : vector<16x32xf32>
    %41 = arith.addf %0, %40 : vector<16x32xf32>
    %c150 = arith.constant 150 : index
    %c0_23 = arith.constant 0 : index
    %42 = vector.load %arg4[%c150, %c0_23] : memref<160x64xf32, #tpu.memory_space<vmem>>, vector<1x32xf32>
    %c151 = arith.constant 151 : index
    %c0_24 = arith.constant 0 : index
    %43 = vector.load %arg4[%c151, %c0_24] : memref<160x64xf32, #tpu.memory_space<vmem>>, vector<1x32xf32>
    %cst_25 = arith.constant dense<0.000000e+00> : vector<16xf32>
    %44 = vector.multi_reduction <add>, %41, %cst_25 [1] : vector<16x32xf32> to vector<16xf32>
    %45 = vector.shape_cast %44 : vector<16xf32> to vector<16x1xf32>
    %cst_26 = arith.constant 3.200000e+01 : f32
    %46 = vector.broadcast %cst_26 : f32 to vector<16x1xf32>
    %47 = arith.divf %45, %46 : vector<16x1xf32>
    %48 = vector.broadcast %47 : vector<16x1xf32> to vector<16x32xf32>
    %49 = arith.subf %41, %48 : vector<16x32xf32>
    %50 = arith.mulf %49, %49 : vector<16x32xf32>
    %cst_27 = arith.constant dense<0.000000e+00> : vector<16xf32>
    %51 = vector.multi_reduction <add>, %50, %cst_27 [1] : vector<16x32xf32> to vector<16xf32>
    %52 = vector.shape_cast %51 : vector<16xf32> to vector<16x1xf32>
    %cst_28 = arith.constant 3.200000e+01 : f32
    %53 = vector.broadcast %cst_28 : f32 to vector<16x1xf32>
    %54 = arith.divf %52, %53 : vector<16x1xf32>
    %cst_29 = arith.constant 9.99999974E-6 : f32
    %55 = vector.broadcast %cst_29 : f32 to vector<16x1xf32>
    %56 = arith.addf %54, %55 : vector<16x1xf32>
    %57 = math.rsqrt %56 : vector<16x1xf32>
    %58 = vector.broadcast %57 : vector<16x1xf32> to vector<16x32xf32>
    %59 = arith.mulf %49, %58 : vector<16x32xf32>
    %60 = vector.broadcast %42 : vector<1x32xf32> to vector<16x32xf32>
    %61 = arith.mulf %59, %60 : vector<16x32xf32>
    %62 = vector.broadcast %43 : vector<1x32xf32> to vector<16x32xf32>
    %63 = arith.addf %61, %62 : vector<16x32xf32>
    %c0_30 = arith.constant 0 : index
    %c512 = arith.constant 512 : index
    %64 = vector.load %arg2[%c0_30, %c512] : memref<32x640xf32, #tpu.memory_space<vmem>>, vector<32x64xf32>
    %cst_31 = arith.constant dense<0.000000e+00> : vector<16x64xf32>
    %65 = tpu.matmul %63, %64, %cst_31 {dimension_numbers = #tpu.dot_dimension_numbers<[1], [0], [0], [1], [0, 0, 1, 1], [], []>} : vector<16x32xf32>, vector<32x64xf32>, vector<16x64xf32> -> vector<16x64xf32>
    %c148 = arith.constant 148 : index
    %c0_32 = arith.constant 0 : index
    %66 = vector.load %arg4[%c148, %c0_32] : memref<160x64xf32, #tpu.memory_space<vmem>>, vector<1x64xf32>
    %67 = vector.broadcast %66 : vector<1x64xf32> to vector<16x64xf32>
    %68 = arith.addf %65, %67 : vector<16x64xf32>
    %cst_33 = arith.constant 0.000000e+00 : f32
    %69 = vector.broadcast %cst_33 : f32 to vector<16x64xf32>
    %70 = arith.maximumf %68, %69 : vector<16x64xf32>
    %c0_34 = arith.constant 0 : index
    %c0_35 = arith.constant 0 : index
    %71 = vector.load %arg3[%c0_34, %c0_35] : memref<64x32xf32, #tpu.memory_space<vmem>>, vector<64x32xf32>
    %cst_36 = arith.constant dense<0.000000e+00> : vector<16x32xf32>
    %72 = tpu.matmul %70, %71, %cst_36 {dimension_numbers = #tpu.dot_dimension_numbers<[1], [0], [0], [1], [0, 0, 1, 1], [], []>} : vector<16x64xf32>, vector<64x32xf32>, vector<16x32xf32> -> vector<16x32xf32>
    %c149 = arith.constant 149 : index
    %c0_37 = arith.constant 0 : index
    %73 = vector.load %arg4[%c149, %c0_37] : memref<160x64xf32, #tpu.memory_space<vmem>>, vector<1x32xf32>
    %74 = vector.broadcast %73 : vector<1x32xf32> to vector<16x32xf32>
    %75 = arith.addf %72, %74 : vector<16x32xf32>
    %76 = arith.addf %63, %75 : vector<16x32xf32>
    %c152 = arith.constant 152 : index
    %c0_38 = arith.constant 0 : index
    %77 = vector.load %arg4[%c152, %c0_38] : memref<160x64xf32, #tpu.memory_space<vmem>>, vector<1x32xf32>
    %c153 = arith.constant 153 : index
    %c0_39 = arith.constant 0 : index
    %78 = vector.load %arg4[%c153, %c0_39] : memref<160x64xf32, #tpu.memory_space<vmem>>, vector<1x32xf32>
    %cst_40 = arith.constant dense<0.000000e+00> : vector<16xf32>
    %79 = vector.multi_reduction <add>, %76, %cst_40 [1] : vector<16x32xf32> to vector<16xf32>
    %80 = vector.shape_cast %79 : vector<16xf32> to vector<16x1xf32>
    %cst_41 = arith.constant 3.200000e+01 : f32
    %81 = vector.broadcast %cst_41 : f32 to vector<16x1xf32>
    %82 = arith.divf %80, %81 : vector<16x1xf32>
    %83 = vector.broadcast %82 : vector<16x1xf32> to vector<16x32xf32>
    %84 = arith.subf %76, %83 : vector<16x32xf32>
    %85 = arith.mulf %84, %84 : vector<16x32xf32>
    %cst_42 = arith.constant dense<0.000000e+00> : vector<16xf32>
    %86 = vector.multi_reduction <add>, %85, %cst_42 [1] : vector<16x32xf32> to vector<16xf32>
    %87 = vector.shape_cast %86 : vector<16xf32> to vector<16x1xf32>
    %cst_43 = arith.constant 3.200000e+01 : f32
    %88 = vector.broadcast %cst_43 : f32 to vector<16x1xf32>
    %89 = arith.divf %87, %88 : vector<16x1xf32>
    %cst_44 = arith.constant 9.99999974E-6 : f32
    %90 = vector.broadcast %cst_44 : f32 to vector<16x1xf32>
    %91 = arith.addf %89, %90 : vector<16x1xf32>
    %92 = math.rsqrt %91 : vector<16x1xf32>
    %93 = vector.broadcast %92 : vector<16x1xf32> to vector<16x32xf32>
    %94 = arith.mulf %84, %93 : vector<16x32xf32>
    %95 = vector.broadcast %77 : vector<1x32xf32> to vector<16x32xf32>
    %96 = arith.mulf %94, %95 : vector<16x32xf32>
    %97 = vector.broadcast %78 : vector<1x32xf32> to vector<16x32xf32>
    %98 = arith.addf %96, %97 : vector<16x32xf32>
    %c0_45 = arith.constant 0 : index
    %c0_46 = arith.constant 0 : index
    %99 = vector.load %arg5[%c0_45, %c0_46] : memref<16x32xf32, #tpu.memory_space<vmem>>, vector<16x32xf32>
    tpu.vector_store %arg5[%c0_45, %c0_46], %98 {strides = array<i32>} : memref<16x32xf32, #tpu.memory_space<vmem>>, vector<16x32xf32>,
    return
  }
  func.func @transform_0(%arg0: i32) -> (i32, i32) {
    %c0_i32 = arith.constant 0 : i32
    %c0_i32_0 = arith.constant 0 : i32
    %c0_i32_1 = arith.constant 0 : i32
    return %c0_i32, %c0_i32_0 : i32, i32
  }
  func.func @transform_1(%arg0: i32) -> (i32, i32) {
    %c0_i32 = arith.constant 0 : i32
    %c0_i32_0 = arith.constant 0 : i32
    %c0_i32_1 = arith.constant 0 : i32
    return %c0_i32, %c0_i32_0 : i32, i32
  }
  func.func @transform_2(%arg0: i32) -> (i32, i32) {
    %c0_i32 = arith.constant 0 : i32
    %c0_i32_0 = arith.constant 0 : i32
    %c0_i32_1 = arith.constant 0 : i32
    return %c0_i32, %c0_i32_0 : i32, i32
  }
  func.func @transform_3(%arg0: i32) -> (i32, i32) {
    %c0_i32 = arith.constant 0 : i32
    %c0_i32_0 = arith.constant 0 : i32
    %c0_i32_1 = arith.constant 0 : i32
    return %c0_i32, %c0_i32_0 : i32, i32
  }
  func.func @transform_4(%arg0: i32) -> (i32, i32) {
    %c0_i32 = arith.constant 0 : i32
    %c0_i32_0 = arith.constant 0 : i32
    %c0_i32_1 = arith.constant 0 : i32
    return %c0_i32, %c0_i32_0 : i32, i32
  }
}

</mosaic_0001>

<llo_original>
// kernel: tpu_custom_call.1
$region0: #{tpu_custom_call.1}
  #allocation0 [shape = 'u32[]', space=smem, size = 0x4, offset = 0x4, fixed_abs, tag = 'smem constant byte address 0x4 - core index']
  #allocation1 [shape = 'u32[72,128]{1,0:T(1,128)}', space=vmem, size = 0x9000, scoped, tag = 'internal scratch']
  %s0 = inlined_call_operand.vmem [shape: f32[32,32], index: 0, kind: input, shape index: {}]
  %s1 = inlined_call_operand.vmem [shape: f32[32,640], index: 1, kind: input, shape index: {}]
  %s2 = inlined_call_operand.vmem [shape: f32[64,32], index: 2, kind: input, shape index: {}]
  %s3 = inlined_call_operand.vmem [shape: f32[160,64], index: 3, kind: input, shape index: {}]
  %s4 = inlined_call_operand.hbm [shape: f32[16,32], index: 4, kind: output, shape index: {}]
  %s5 = sld [smem:[#allocation0]]
  $region26: #{tpu_custom_call.1} parent=0
    _
  %s7 = ssub.s32 1, %s5
  %s8 = scalar_select 0, %s7, %s5
  $region1: #{tpu_custom_call.1} parent=0
    #allocation2 [shape = 'u8[8192]{0}', space=vmem, size = 0x2000, scoped, tag = 'output window, operand 0, single buffered']
    #allocation3 [shape = 's32[1]{0}', space=sflag, size = 0x4, scoped, tag = 'scoped memory for tpu_custom_call.1']
    %9 = vsyncpa [#allocation3], 0
    // Predicated region
    $region2: #{tpu_custom_call.1} parent=1 // pred_check
      _
    $region3: #{tpu_custom_call.1} parent=1 // pred_check_branch
      %11 = sbr.rel (0) target = $region5
    $region4: #{tpu_custom_call.1} parent=1 // pred_region
      _
    $region5: #{tpu_custom_call.1} parent=1 // pred_fallthru
      _
    // Predicated region
    $region6: #{tpu_custom_call.1} parent=1 // pred_check
      _
    $region7: #{tpu_custom_call.1} parent=1 // pred_check_branch
      %13 = sbr.rel (0) target = $region9
    $region8: #{tpu_custom_call.1} parent=1 // pred_region
      _
    $region9: #{tpu_custom_call.1} parent=1 // pred_fallthru
      _
    // Predicated region
    $region10: #{tpu_custom_call.1} parent=1 // pred_check
      _
    $region11: #{tpu_custom_call.1} parent=1 // pred_check_branch
      %15 = sbr.rel (0) target = $region13
    $region12: #{tpu_custom_call.1} parent=1 // pred_region
      _
    $region13: #{tpu_custom_call.1} parent=1 // pred_fallthru
      _
    // Predicated region
    $region14: #{tpu_custom_call.1} parent=1 // pred_check
      _
    $region15: #{tpu_custom_call.1} parent=1 // pred_check_branch
      %17 = sbr.rel (0) target = $region17
    $region16: #{tpu_custom_call.1} parent=1 // pred_region
      _
    $region17: #{tpu_custom_call.1} parent=1 // pred_fallthru
      _
    %v18 = vld [vmem:[%s0] sm:$0xff]
    %v19 = vld [vmem:[%s0 + $0x8] sm:$0xff]
    %v20 = vld [vmem:[%s0 + $0x10] sm:$0xff]
    %v21 = vld [vmem:[%s0 + $0x18] sm:$0xff]
    %v22 = vadd.f32 %v18, %v20
    %v23 = vadd.f32 %v19, %v21
    %v24 = vld [vmem:[%s1] sm:$0xff]
    %v25 = vld [vmem:[%s1 + $0x28] sm:$0xff]
    %v26 = vld [vmem:[%s1 + $0x50] sm:$0xff]
    %v27 = vld [vmem:[%s1 + $0x78] sm:$0xff]
    %v28 = vld [vmem:[%s3 + $0x90] sm:$0x1]
    %v29 = vperm.slane %v28, 0
    %vm30 = vcmask 261120
    %v32 = vsel %vm30, %v22, 0
    %v35 = vsel %vm30, %v23, 0
    %37 = vmatpush.msra.mxu0 0.0
    %38 = vmatpush.msra.mxu0 0.0
    %39 = vmatpush.msra.mxu0 0.0
    %40 = vmatpush.msra.mxu0 0.0
    %41 = vmatpush.msra.mxu0 0.0
    %42 = vmatpush.msra.mxu0 0.0
    %43 = vmatpush.msra.mxu0 0.0
    %44 = vmatpush.msra.mxu0 0.0
    %45 = vmatpush.msra.mxu0 0.0
    %46 = vmatpush.msra.mxu0 0.0
    %47 = vmatpush.msra.mxu0 0.0
    %48 = vmatpush.msra.mxu0 0.0
    %49 = vmatpush.msra.mxu0 %v27
    %50 = vmatpush.msra.mxu0 %v26
    %51 = vmatpush.msra.mxu0 %v25
    %52 = vmatpush.msra.mxu0 %v24
    %53 = vmatmul.f32.gmra.mxu0 %v32
    %v54 = vpop.f32.mrf.mxu0
    %v55 = vadd.f32 %v29, %v54
    %56 = vmatmul.f32.gmra.mxu0 %v35
    %v57 = vpop.f32.mrf.mxu0
    %v58 = vadd.f32 %v29, %v57
    %59 = vdwg.mxu0
    %v60 = vld [vmem:[%s1 + $0x8] sm:$0xff]
    %v61 = vld [vmem:[%s1 + $0x30] sm:$0xff]
    %v62 = vld [vmem:[%s1 + $0x58] sm:$0xff]
    %v63 = vld [vmem:[%s1 + $0x80] sm:$0xff]
    %v64 = vld [vmem:[%s3 + $0x91] sm:$0x1]
    %v65 = vperm.slane %v64, 0
    %66 = vmatpush.msra.mxu0 0.0
    %67 = vmatpush.msra.mxu0 0.0
    %68 = vmatpush.msra.mxu0 0.0
    %69 = vmatpush.msra.mxu0 0.0
    %70 = vmatpush.msra.mxu0 0.0
    %71 = vmatpush.msra.mxu0 0.0
    %72 = vmatpush.msra.mxu0 0.0
    %73 = vmatpush.msra.mxu0 0.0
    %74 = vmatpush.msra.mxu0 0.0
    %75 = vmatpush.msra.mxu0 0.0
    %76 = vmatpush.msra.mxu0 0.0
    %77 = vmatpush.msra.mxu0 0.0
    %78 = vmatpush.msra.mxu0 %v63
    %79 = vmatpush.msra.mxu0 %v62
    %80 = vmatpush.msra.mxu0 %v61
    %81 = vmatpush.msra.mxu0 %v60
    %82 = vmatmul.f32.gmra.mxu0 %v32
    %v83 = vpop.f32.mrf.mxu0
    %v84 = vadd.f32 %v65, %v83
    %85 = vmatmul.f32.gmra.mxu0 %v35
    %v86 = vpop.f32.mrf.mxu0
    %v87 = vadd.f32 %v65, %v86
    %88 = vdwg.mxu0
    %v89 = vld [vmem:[%s1 + $0x10] sm:$0xff]
    %v90 = vld [vmem:[%s1 + $0x38] sm:$0xff]
    %v91 = vld [vmem:[%s1 + $0x60] sm:$0xff]
    %v92 = vld [vmem:[%s1 + $0x88] sm:$0xff]
    %v93 = vld [vmem:[%s3 + $0x92] sm:$0x1]
    %v94 = vperm.slane %v93, 0
    %v96 = vsel %vm30, %v18, 0
    %v99 = vsel %vm30, %v19, 0
    %101 = vmatpush.msra.mxu0 0.0
    %102 = vmatpush.msra.mxu0 0.0
    %103 = vmatpush.msra.mxu0 0.0
    %104 = vmatpush.msra.mxu0 0.0
    %105 = vmatpush.msra.mxu0 0.0
    %106 = vmatpush.msra.mxu0 0.0
    %107 = vmatpush.msra.mxu0 0.0
    %108 = vmatpush.msra.mxu0 0.0
    %109 = vmatpush.msra.mxu0 0.0
    %110 = vmatpush.msra.mxu0 0.0
    %111 = vmatpush.msra.mxu0 0.0
    %112 = vmatpush.msra.mxu0 0.0
    %113 = vmatpush.msra.mxu0 %v92
    %114 = vmatpush.msra.mxu0 %v91
    %115 = vmatpush.msra.mxu0 %v90
    %116 = vmatpush.msra.mxu0 %v89
    %117 = vmatmul.f32.gmra.mxu0 %v96
    %v118 = vpop.f32.mrf.mxu0
    %v119 = vadd.f32 %v94, %v118
    %120 = vmatmul.f32.gmra.mxu0 %v99
    %v121 = vpop.f32.mrf.mxu0
    %v122 = vadd.f32 %v94, %v121
    %123 = vdwg.mxu0
    %v124 = vld [vmem:[%s3] sm:$0xff]
    %v125 = vld [vmem:[%s3 + $0x8] sm:$0xff]
    %v126 = vld [vmem:[%s3 + $0x10] sm:$0xff]
    %v127 = vld [vmem:[%s3 + $0x18] sm:$0xff]
    %v128 = vld [vmem:[%s3 + $0x20] sm:$0xff]
    %v129 = vld [vmem:[%s3 + $0x28] sm:$0xff]
    %v130 = vld [vmem:[%s3 + $0x30] sm:$0xff]
    %v131 = vld [vmem:[%s3 + $0x38] sm:$0xff]
    %v132 = vmul.f32 %v84, %v124
    %v133 = vmul.f32 %v87, %v125
    %v134 = vmul.f32 %v84, %v126
    %v135 = vmul.f32 %v87, %v127
    %v136 = vmul.f32 %v84, %v128
    %v137 = vmul.f32 %v87, %v129
    %v138 = vmul.f32 %v84, %v130
    %v139 = vmul.f32 %v87, %v131
    %v140 = vmul.f32 %v119, %v124
    %v141 = vmul.f32 %v122, %v125
    %v142 = vmul.f32 %v119, %v126
    %v143 = vmul.f32 %v122, %v127
    %v144 = vmul.f32 %v119, %v128
    %v145 = vmul.f32 %v122, %v129
    %v146 = vmul.f32 %v119, %v130
    %v147 = vmul.f32 %v122, %v131
    %v148 = vld [vmem:[%s3 + $0x80] sm:$0xff]
    %v149 = vld [vmem:[%s3 + $0x88] sm:$0xff]
    %v151 = vsel %vm30, %v55, 0
    %v154 = vsel %vm30, %v58, 0
    %v157 = vsel %vm30, %v132, 0
    %v160 = vsel %vm30, %v133, 0
    %v163 = vsel %vm30, %v134, 0
    %v166 = vsel %vm30, %v135, 0
    %v169 = vsel %vm30, %v136, 0
    %v172 = vsel %vm30, %v137, 0
    %v175 = vsel %vm30, %v138, 0
    %v178 = vsel %vm30, %v139, 0
    %180 = vmatpush.xpose.msra.mxu0 0.0
    %181 = vmatpush.xpose.msra.mxu0 0.0
    %182 = vmatpush.xpose.msra.mxu0 0.0
    %183 = vmatpush.xpose.msra.mxu0 0.0
    %184 = vmatpush.xpose.msra.mxu0 0.0
    %185 = vmatpush.xpose.msra.mxu0 0.0
    %186 = vmatpush.xpose.msra.mxu0 0.0
    %187 = vmatpush.xpose.msra.mxu0 0.0
    %188 = vmatpush.xpose.msra.mxu0 %v178
    %189 = vmatpush.xpose.msra.mxu0 %v175
    %190 = vmatpush.xpose.msra.mxu0 %v172
    %191 = vmatpush.xpose.msra.mxu0 %v169
    %192 = vmatpush.xpose.msra.mxu0 %v166
    %193 = vmatpush.xpose.msra.mxu0 %v163
    %194 = vmatpush.xpose.msra.mxu0 %v160
    %195 = vmatpush.xpose.msra.mxu0 %v157
    %196 = vmatmul.f32.gmra.mxu0 %v151
    %v197 = vpop.f32.mrf.mxu0
    %v198 = vadd.f32 %v148, %v197
    %199 = vmatmul.f32.gmra.mxu0 %v154
    %v200 = vpop.f32.mrf.mxu0
    %v201 = vadd.f32 %v149, %v200
    %202 = vdwg.mxu0
    %vm203 = vcmask 523264
    %v204 = vsel %vm203, %v198, -inf
    %205 = vmax.xlane.f32.xlu0 %v204
    %v206 = vpop.xlane.xlu0 %205
    %v207 = vsel %vm203, %v201, -inf
    %208 = vmax.xlane.f32.xlu0 %v207
    %v209 = vpop.xlane.xlu0 %208
    %v210 = vsub.f32 %v198, %v206
    %v211 = vsub.f32 %v201, %v209
    %v212 = vmul.f32 %v210, 1.442695
    %v213 = vpow.pop %v212
    %v214 = vmul.f32 %v211, 1.442695
    %v215 = vpow.pop %v214
    %v216 = vld [vmem:[%s3 + $0x40] sm:$0xff]
    %v217 = vld [vmem:[%s3 + $0x48] sm:$0xff]
    %v218 = vld [vmem:[%s3 + $0x50] sm:$0xff]
    %v219 = vld [vmem:[%s3 + $0x58] sm:$0xff]
    %v220 = vld [vmem:[%s3 + $0x60] sm:$0xff]
    %v221 = vld [vmem:[%s3 + $0x68] sm:$0xff]
    %v222 = vld [vmem:[%s3 + $0x70] sm:$0xff]
    %v223 = vld [vmem:[%s3 + $0x78] sm:$0xff]
    %v225 = vsel %vm203, %v213, 0
    %v228 = vsel %vm203, %v215, 0
    %230 = vmatpush.msra.mxu0 0.0
    %231 = vmatpush.msra.mxu0 0.0
    %232 = vmatpush.msra.mxu0 0.0
    %233 = vmatpush.msra.mxu0 0.0
    %234 = vmatpush.msra.mxu0 0.0
    %235 = vmatpush.msra.mxu0 0.0
    %236 = vmatpush.msra.mxu0 0.0
    %237 = vmatpush.msra.mxu0 0.0
    %238 = vmatpush.msra.mxu0 %v223
    %239 = vmatpush.msra.mxu0 %v222
    %240 = vmatpush.msra.mxu0 %v221
    %241 = vmatpush.msra.mxu0 %v220
    %242 = vmatpush.msra.mxu0 %v219
    %243 = vmatpush.msra.mxu0 %v218
    %244 = vmatpush.msra.mxu0 %v217
    %245 = vmatpush.msra.mxu0 %v216
    %246 = vmatmul.f32.gmra.mxu0 %v225
    %v247 = vpop.f32.mrf.mxu0
    %v248 = vadd.f32 0.0, %v247
    %249 = vmatmul.f32.gmra.mxu0 %v228
    %v250 = vpop.f32.mrf.mxu0
    %v251 = vadd.f32 0.0, %v250
    %252 = vdwg.mxu0
    %v253 = vrcp.pop %v248
    %v254 = vrcp.pop %v251
    %v255 = vmul.f32 %v213, %v253
    %v256 = vmul.f32 %v215, %v254
    %v258 = vsel %vm203, %v255, 0
    %v261 = vsel %vm203, %v256, 0
    %263 = vmatpush.msra.mxu0 0.0
    %264 = vmatpush.msra.mxu0 0.0
    %265 = vmatpush.msra.mxu0 0.0
    %266 = vmatpush.msra.mxu0 0.0
    %267 = vmatpush.msra.mxu0 0.0
    %268 = vmatpush.msra.mxu0 0.0
    %269 = vmatpush.msra.mxu0 0.0
    %270 = vmatpush.msra.mxu0 0.0
    %271 = vmatpush.msra.mxu0 %v147
    %272 = vmatpush.msra.mxu0 %v146
    %273 = vmatpush.msra.mxu0 %v145
    %274 = vmatpush.msra.mxu0 %v144
    %275 = vmatpush.msra.mxu0 %v143
    %276 = vmatpush.msra.mxu0 %v142
    %277 = vmatpush.msra.mxu0 %v141
    %278 = vmatpush.msra.mxu0 %v140
    %279 = vmatmul.f32.gmra.mxu0 %v258
    %v280 = vpop.f32.mrf.mxu0
    %v281 = vadd.f32 0.0, %v280
    %282 = vmatmul.f32.gmra.mxu0 %v261
    %v283 = vpop.f32.mrf.mxu0
    %v284 = vadd.f32 0.0, %v283
    %285 = vdwg.mxu0
    %v286 = vld [vmem:[%s1 + $0x18] sm:$0xff]
    %v287 = vld [vmem:[%s1 + $0x40] sm:$0xff]
    %v288 = vld [vmem:[%s1 + $0x68] sm:$0xff]
    %v289 = vld [vmem:[%s1 + $0x90] sm:$0xff]
    %v290 = vld [vmem:[%s3 + $0x93] sm:$0x1]
    %v291 = vperm.slane %v290, 0
    %v293 = vsel %vm30, %v281, 0
    %v296 = vsel %vm30, %v284, 0
    %298 = vmatpush.msra.mxu0 0.0
    %299 = vmatpush.msra.mxu0 0.0
    %300 = vmatpush.msra.mxu0 0.0
    %301 = vmatpush.msra.mxu0 0.0
    %302 = vmatpush.msra.mxu0 0.0
    %303 = vmatpush.msra.mxu0 0.0
    %304 = vmatpush.msra.mxu0 0.0
    %305 = vmatpush.msra.mxu0 0.0
    %306 = vmatpush.msra.mxu0 0.0
    %307 = vmatpush.msra.mxu0 0.0
    %308 = vmatpush.msra.mxu0 0.0
    %309 = vmatpush.msra.mxu0 0.0
    %310 = vmatpush.msra.mxu0 %v289
    %311 = vmatpush.msra.mxu0 %v288
    %312 = vmatpush.msra.mxu0 %v287
    %313 = vmatpush.msra.mxu0 %v286
    %314 = vmatmul.f32.gmra.mxu0 %v293
    %v315 = vpop.f32.mrf.mxu0
    %v316 = vadd.f32 %v291, %v315
    %317 = vmatmul.f32.gmra.mxu0 %v296
    %v318 = vpop.f32.mrf.mxu0
    %v319 = vadd.f32 %v291, %v318
    %320 = vdwg.mxu0
    %v321 = vadd.f32 %v18, %v316
    %v322 = vadd.f32 %v19, %v319
    %v323 = vld [vmem:[%s3 + $0x96] sm:$0x1]
    %v324 = vld [vmem:[%s3 + $0x97] sm:$0x1]
    %v325 = vsel %vm30, %v321, 0.0
    %326 = vadd.xlane.f32.xlu0 %v325
    %v327 = vpop.xlane.xlu0 %326
    %v328 = vsel %vm30, %v322, 0.0
    %329 = vadd.xlane.f32.xlu0 %v328
    %v330 = vpop.xlane.xlu0 %329
    %v331 = vrcp.pop 32.0
    %v332 = vmul.f32 32.0, %v331
    %v333 = vsub.f32 1.0, %v332
    %v334 = vmul.f32 %v331, %v333
    %v335 = vadd.f32 %v331, %v334
    %vm336 = vweird.f32 %v331
    %v337 = vsel %vm336, %v331, %v335
    %v338 = vmul.f32 %v327, %v337
    %v339 = vmul.f32 %v330, %v337
    %v340 = vsub.f32 %v321, %v338
    %v341 = vsub.f32 %v322, %v339
    %v342 = vmul.f32 %v340, %v340
    %v343 = vmul.f32 %v341, %v341
    %v344 = vsel %vm30, %v342, 0.0
    %345 = vadd.xlane.f32.xlu0 %v344
    %v346 = vpop.xlane.xlu0 %345
    %v347 = vsel %vm30, %v343, 0.0
    %348 = vadd.xlane.f32.xlu0 %v347
    %v349 = vpop.xlane.xlu0 %348
    %v350 = vmul.f32 %v346, %v337
    %v351 = vmul.f32 %v349, %v337
    %v352 = vadd.f32 %v350, 1e-05
    %v353 = vadd.f32 %v351, 1e-05
    %v354 = vrsqrt.pop %v352
    %v355 = vmul.f32 %v354, %v352
    %v356 = vmul.f32 %v355, %v354
    %v357 = vmul.f32 0.5, %v356
    %v358 = vsub.f32 1.5, %v357
    %v359 = vmul.f32 %v354, %v358
    %vm360 = vweird.f32 %v352
    %vm361 = vweird.f32 %v354
    %vm362 = vmor %vm360, %vm361
    %v363 = vsel %vm362, %v354, %v359
    %v364 = vrsqrt.pop %v353
    %v365 = vmul.f32 %v364, %v353
    %v366 = vmul.f32 %v365, %v364
    %v367 = vmul.f32 0.5, %v366
    %v368 = vsub.f32 1.5, %v367
    %v369 = vmul.f32 %v364, %v368
    %vm370 = vweird.f32 %v353
    %vm371 = vweird.f32 %v364
    %vm372 = vmor %vm370, %vm371
    %v373 = vsel %vm372, %v364, %v369
    %v374 = vmul.f32 %v340, %v363
    %v375 = vmul.f32 %v341, %v373
    %v376 = vperm.slane %v323, 0
    %v377 = vmul.f32 %v374, %v376
    %v378 = vmul.f32 %v375, %v376
    %v379 = vperm.slane %v324, 0
    %v380 = vadd.f32 %v377, %v379
    %v381 = vadd.f32 %v378, %v379
    %v382 = vld [vmem:[%s1 + $0x20] sm:$0xff]
    %v383 = vld [vmem:[%s1 + $0x48] sm:$0xff]
    %v384 = vld [vmem:[%s1 + $0x70] sm:$0xff]
    %v385 = vld [vmem:[%s1 + $0x98] sm:$0xff]
    %v386 = vld [vmem:[%s3 + $0x94] sm:$0x1]
    %v387 = vperm.slane %v386, 0
    %v389 = vsel %vm30, %v380, 0
    %v392 = vsel %vm30, %v381, 0
    %394 = vmatpush.msra.mxu0 0.0
    %395 = vmatpush.msra.mxu0 0.0
    %396 = vmatpush.msra.mxu0 0.0
    %397 = vmatpush.msra.mxu0 0.0
    %398 = vmatpush.msra.mxu0 0.0
    %399 = vmatpush.msra.mxu0 0.0
    %400 = vmatpush.msra.mxu0 0.0
    %401 = vmatpush.msra.mxu0 0.0
    %402 = vmatpush.msra.mxu0 0.0
    %403 = vmatpush.msra.mxu0 0.0
    %404 = vmatpush.msra.mxu0 0.0
    %405 = vmatpush.msra.mxu0 0.0
    %406 = vmatpush.msra.mxu0 %v385
    %407 = vmatpush.msra.mxu0 %v384
    %408 = vmatpush.msra.mxu0 %v383
    %409 = vmatpush.msra.mxu0 %v382
    %410 = vmatmul.f32.gmra.mxu0 %v389
    %v411 = vpop.f32.mrf.mxu0
    %v412 = vadd.f32 %v387, %v411
    %413 = vmatmul.f32.gmra.mxu0 %v392
    %v414 = vpop.f32.mrf.mxu0
    %v415 = vadd.f32 %v387, %v414
    %416 = vdwg.mxu0
    %v417 = vmax.f32 %v412, 0.0
    %v418 = vmax.f32 %v415, 0.0
    %v419 = vld [vmem:[%s2] sm:$0xff]
    %v420 = vld [vmem:[%s2 + $0x8] sm:$0xff]
    %v421 = vld [vmem:[%s2 + $0x10] sm:$0xff]
    %v422 = vld [vmem:[%s2 + $0x18] sm:$0xff]
    %v423 = vld [vmem:[%s2 + $0x20] sm:$0xff]
    %v424 = vld [vmem:[%s2 + $0x28] sm:$0xff]
    %v425 = vld [vmem:[%s2 + $0x30] sm:$0xff]
    %v426 = vld [vmem:[%s2 + $0x38] sm:$0xff]
    %v427 = vld [vmem:[%s3 + $0x95] sm:$0x1]
    %v428 = vperm.slane %v427, 0
    %v430 = vsel %vm203, %v417, 0
    %v433 = vsel %vm203, %v418, 0
    %435 = vmatpush.msra.mxu0 0.0
    %436 = vmatpush.msra.mxu0 0.0
    %437 = vmatpush.msra.mxu0 0.0
    %438 = vmatpush.msra.mxu0 0.0
    %439 = vmatpush.msra.mxu0 0.0
    %440 = vmatpush.msra.mxu0 0.0
    %441 = vmatpush.msra.mxu0 0.0
    %442 = vmatpush.msra.mxu0 0.0
    %443 = vmatpush.msra.mxu0 %v426
    %444 = vmatpush.msra.mxu0 %v425
    %445 = vmatpush.msra.mxu0 %v424
    %446 = vmatpush.msra.mxu0 %v423
    %447 = vmatpush.msra.mxu0 %v422
    %448 = vmatpush.msra.mxu0 %v421
    %449 = vmatpush.msra.mxu0 %v420
    %450 = vmatpush.msra.mxu0 %v419
    %451 = vmatmul.f32.gmra.mxu0 %v430
    %v452 = vpop.f32.mrf.mxu0
    %v453 = vadd.f32 %v428, %v452
    %454 = vmatmul.f32.gmra.mxu0 %v433
    %v455 = vpop.f32.mrf.mxu0
    %v456 = vadd.f32 %v428, %v455
    %457 = vdwg.mxu0
    %v458 = vadd.f32 %v380, %v453
    %v459 = vadd.f32 %v381, %v456
    %v460 = vld [vmem:[%s3 + $0x98] sm:$0x1]
    %v461 = vld [vmem:[%s3 + $0x99] sm:$0x1]
    %v462 = vsel %vm30, %v458, 0.0
    %463 = vadd.xlane.f32.xlu0 %v462
    %v464 = vpop.xlane.xlu0 %463
    %v465 = vsel %vm30, %v459, 0.0
    %466 = vadd.xlane.f32.xlu0 %v465
    %v467 = vpop.xlane.xlu0 %466
    %v468 = vmul.f32 %v464, %v337
    %v469 = vmul.f32 %v467, %v337
    %v470 = vsub.f32 %v458, %v468
    %v471 = vsub.f32 %v459, %v469
    %v472 = vmul.f32 %v470, %v470
    %v473 = vmul.f32 %v471, %v471
    %v474 = vsel %vm30, %v472, 0.0
    %475 = vadd.xlane.f32.xlu0 %v474
    %v476 = vpop.xlane.xlu0 %475
    %v477 = vsel %vm30, %v473, 0.0
    %478 = vadd.xlane.f32.xlu0 %v477
    %v479 = vpop.xlane.xlu0 %478
    %v480 = vmul.f32 %v476, %v337
    %v481 = vmul.f32 %v479, %v337
    %v482 = vadd.f32 %v480, 1e-05
    %v483 = vadd.f32 %v481, 1e-05
    %v484 = vrsqrt.pop %v482
    %v485 = vmul.f32 %v484, %v482
    %v486 = vmul.f32 %v485, %v484
    %v487 = vmul.f32 0.5, %v486
    %v488 = vsub.f32 1.5, %v487
    %v489 = vmul.f32 %v484, %v488
    %vm490 = vweird.f32 %v482
    %vm491 = vweird.f32 %v484
    %vm492 = vmor %vm490, %vm491
    %v493 = vsel %vm492, %v484, %v489
    %v494 = vrsqrt.pop %v483
    %v495 = vmul.f32 %v494, %v483
    %v496 = vmul.f32 %v495, %v494
    %v497 = vmul.f32 0.5, %v496
    %v498 = vsub.f32 1.5, %v497
    %v499 = vmul.f32 %v494, %v498
    %vm500 = vweird.f32 %v483
    %vm501 = vweird.f32 %v494
    %vm502 = vmor %vm500, %vm501
    %v503 = vsel %vm502, %v494, %v499
    %v504 = vmul.f32 %v470, %v493
    %v505 = vmul.f32 %v471, %v503
    %v506 = vperm.slane %v460, 0
    %v507 = vmul.f32 %v504, %v506
    %v508 = vmul.f32 %v505, %v506
    %v509 = vperm.slane %v461, 0
    %v510 = vadd.f32 %v507, %v509
    %v511 = vadd.f32 %v508, %v509
    %512 = vst.msk [vmem:[#allocation2] sm:$0xff] %vm30, %v510
    %513 = vst.msk [vmem:[#allocation2 + $0x8] sm:$0xff] %vm30, %v511
    // Predicated region
    $region18: #{tpu_custom_call.1} parent=1 // pred_check
      _
    $region19: #{tpu_custom_call.1} parent=1 // pred_check_branch
      %515 = sbr.rel (0) target = $region21
    $region20: #{tpu_custom_call.1} parent=1 // pred_region
      %517 = vsyncadd [#allocation3], 0
      %s518 = sshll.u32 [#allocation2], 4
      %s519 = int_to_ptr.vmem [resolvable:$true] %s518
      %s520 = sshll.u32 %s4, 4
      %s521 = int_to_ptr.hbm [resolvable:$true] %s520
      %526 = dma.vmem_to_hbm [thread:$0]  %s519, 256, %s521, [#allocation3], 128, 128, 8
    $region21: #{tpu_custom_call.1} parent=1 // pred_fallthru
      _
    // Predicated region
    $region22: #{tpu_custom_call.1} parent=1 // pred_check
      _
    $region23: #{tpu_custom_call.1} parent=1 // pred_check_branch
      %528 = sbr.rel (0) target = $region25
    $region24: #{tpu_custom_call.1} parent=1 // pred_region
      %530 = dma.done [#allocation3], 256
    $region25: #{tpu_custom_call.1} parent=1 // pred_fallthru
      _
    %531 = vsyncpa [#allocation3], 1

</llo_original>
